<compile_context>
chip_gen: v5e
topology: v5e:2x2
jax: 0.10.0
libtpu: 0.0.40
codegen_flags: <defaults>
</compile_context>

<pallas_src>
import math

import jax
import jax.numpy as jnp
import numpy as np
from jax import lax
from jax.experimental import pallas as pl
from jax.experimental.pallas import tpu as pltpu


# ----------------------------- small helpers --------------------------------

def _silu(x):
    return x * jax.nn.sigmoid(x)


def _erf_poly(x):
    # Abramowitz & Stegun 7.1.26 (max abs err ~1.5e-7); exp-only (EUP path).
    a1, a2, a3, a4, a5 = (0.254829592, -0.284496736, 1.421413741,
                          -1.453152027, 1.061405429)
    p = 0.3275911
    sgn = jnp.where(x >= 0.0, 1.0, -1.0)
    ax = jnp.abs(x)
    t = 1.0 / (1.0 + p * ax)
    poly = ((((a5 * t + a4) * t + a3) * t + a2) * t + a1) * t
    return sgn * (1.0 - poly * jnp.exp(-ax * ax))


def _gelu_exact(x):
    # torch nn.GELU() default = exact erf-based GELU.
    return 0.5 * x * (1.0 + _erf_poly(x * (1.0 / math.sqrt(2.0))))


def _cdiv(a, b):
    return -(-a // b)


def _default_vmem_limit():
    # v5e/v6e: 128 MiB physical VMEM -> 64 MiB scoped; v7x: 64 MiB -> 32 MiB.
    try:
        cap = int(pltpu.get_tpu_info().vmem_capacity_bytes)
    except Exception:          # unknown chip / interpret mode -> conservative
        return 32 * 1024 * 1024
    return max(32 * 1024 * 1024, min(96 * 1024 * 1024, cap // 2))


def _lane_tile(n, bytes_per_col, slab_bytes, max_tile):
    """Streaming tile along a lane (last-dim) axis of extent n.

    Returns the full extent when it fits one slab (always a legal block
    shape), otherwise the largest 128-aligned tile whose per-step streamed
    bytes are ~slab_bytes (multi-MiB slabs keep the DMA stream on its
    roofline and amortize the ~0.35 us/step grid overhead).  Never falls back
    to an oversized full extent (v2's _pick_tile bug); ragged tails are
    handled by the callers.
    """
    t = (slab_bytes // max(int(bytes_per_col), 1)) // 128 * 128
    t = max(128, min(t, max_tile))
    if n <= t:
        return n
    return t


# --------------------------- Pallas kernels ---------------------------------

def conv1x1_bn_silu_kernel(x_ref, wt_ref, bias_ref, o_ref):
    """1x1 conv + folded BN + SiLU, NCHW-native, bf16 lane-dense output.

    x_ref: (Cin, thw) f32/bf16   wt_ref: (Cout, Cin) bf16 (BN scale folded)
    bias_ref: (Cout, 1) f32      o_ref: (Cout, thw) bf16
    """
    # The astype is a no-op when callers feed bf16; kept in-kernel (instead of
    # an XLA pre-pass) so x is read from HBM exactly once.
    y = jnp.dot(wt_ref[...], x_ref[...].astype(jnp.bfloat16),
                preferred_element_type=jnp.float32)
    y = y + bias_ref[...]
    o_ref[...] = _silu(y).astype(o_ref.dtype)


def _make_fc1_kernel(F, tF, bps, ragged):
    def kernel(q_ref, w1_ref, o_ref, acc_ref):
        k = pl.program_id(1)

        @pl.when(k == 0)
        def _():
            acc_ref[...] = jnp.zeros_like(acc_ref)

        q = q_ref[...]
        if ragged:
            # Zero the activation tail of the (partially OOB) last block so
            # garbage never enters the reduction (w1's padded rows are zero).
            blk = pl.program_id(0) * bps + k
            col = blk * tF + lax.broadcasted_iota(jnp.int32, q.shape, 1)
            q = jnp.where(col < F, q, jnp.zeros_like(q))

        acc_ref[...] += jnp.dot(q, w1_ref[...],
                                preferred_element_type=jnp.float32)

        @pl.when(k == pl.num_programs(1) - 1)
        def _():
            o_ref[...] = acc_ref[...]

    return kernel


def mlp_fc2_kernel(hpre_ref, b1_ref, w2_ref, b2_ref, o_ref):
    # fc1 bias + exact GELU recomputed per column tile on the tiny resident
    # (B, hidden) block — free filler under the w2 DMA stream.
    hact = _gelu_exact(hpre_ref[...] + b1_ref[...]).astype(jnp.bfloat16)
    y = jnp.dot(hact, w2_ref[...], preferred_element_type=jnp.float32)
    o_ref[...] = y + b2_ref[...]


# ------------------------------ wrappers ------------------------------------

def conv1x1_bn_silu(x_nchw, wt, bias, thw, *, vmem_limit):
    """x: (B, Cin, H, W) -> (B, Cout, H*W) bf16, NCHW-native (no transposes)."""
    B, Cin, H, W = x_nchw.shape
    Cout = wt.shape[0]
    HW = H * W
    x3 = x_nchw.reshape(B, Cin, HW)
    return pl.pallas_call(
        conv1x1_bn_silu_kernel,
        out_shape=jax.ShapeDtypeStruct((B, Cout, HW), jnp.bfloat16),
        grid_spec=pltpu.PrefetchScalarGridSpec(
            num_scalar_prefetch=0,
            grid=(B, _cdiv(HW, thw)),
            in_specs=[
                pl.BlockSpec((None, Cin, thw), lambda b, s: (b, 0, s)),
                pl.BlockSpec((Cout, Cin), lambda b, s: (0, 0)),
                pl.BlockSpec((Cout, 1), lambda b, s: (0, 0)),
            ],
            out_specs=pl.BlockSpec((None, Cout, thw), lambda b, s: (b, 0, s)),
        ),
        compiler_params=pltpu.CompilerParams(
            dimension_semantics=("parallel", "parallel"),
            vmem_limit_bytes=vmem_limit),
    )(x3, wt, bias)


def mlp_fc1_partial(q_flat, spec, *, vmem_limit):
    """Streamed partial fc1 matmul for one pyramid scale.

    q_flat: (B, F) bf16 (free reshape of a conv output); spec["w1"]:
    (shards*bps*tF, hidden) bf16 with zero-padded rows.  Returns per-shard
    partial sums (shards, B, hidden) f32 — bias / GELU applied later."""
    B = q_flat.shape[0]
    w1 = spec["w1"]
    F, tF, shards, bps = spec["F"], spec["tF"], spec["shards"], spec["bps"]
    hidden = w1.shape[1]
    kernel = _make_fc1_kernel(F, tF, bps, (F % tF) != 0)
    return pl.pallas_call(
        kernel,
        out_shape=jax.ShapeDtypeStruct((shards, B, hidden), jnp.float32),
        grid_spec=pltpu.PrefetchScalarGridSpec(
            num_scalar_prefetch=0,
            grid=(shards, bps),
            in_specs=[
                pl.BlockSpec((B, tF), lambda s, k: (0, s * bps + k)),
                pl.BlockSpec((tF, hidden), lambda s, k: (s * bps + k, 0)),
            ],
            out_specs=pl.BlockSpec((None, B, hidden), lambda s, k: (s, 0, 0)),
            scratch_shapes=[pltpu.VMEM((B, hidden), jnp.float32)],
        ),
        compiler_params=pltpu.CompilerParams(
            dimension_semantics=("parallel", "arbitrary"),
            vmem_limit_bytes=vmem_limit),
    )(q_flat, w1)


def mlp_fc2(h_pre, b1, w2, b2, tN, *, vmem_limit):
    """h_pre: (B, hidden) f32 pre-activation; w2: (hidden, Fout) bf16."""
    B, hidden = h_pre.shape
    Fout = w2.shape[1]
    return pl.pallas_call(
        mlp_fc2_kernel,
        out_shape=jax.ShapeDtypeStruct((B, Fout), jnp.float32),
        grid_spec=pltpu.PrefetchScalarGridSpec(
            num_scalar_prefetch=0,
            grid=(_cdiv(Fout, tN),),
            in_specs=[
                pl.BlockSpec((B, hidden), lambda j: (0, 0)),
                pl.BlockSpec((1, hidden), lambda j: (0, 0)),
                pl.BlockSpec((hidden, tN), lambda j: (0, j)),
                pl.BlockSpec((1, tN), lambda j: (0, j)),
            ],
            out_specs=pl.BlockSpec((B, tN), lambda j: (0, j)),
        ),
        compiler_params=pltpu.CompilerParams(
            dimension_semantics=("parallel",),
            vmem_limit_bytes=vmem_limit),
    )(h_pre, b1, w2, b2)


# ------------------------- parameter preparation ----------------------------

def _fold_rows(w_block, C, H, W, h, w):
    """Fold nearest-neighbour upsampling (h,w)->(H,W) into fc1 weight rows by
    summing the rows of duplicated spatial positions (exact reassociation),
    done in f32 before any bf16 cast."""
    hidden = w_block.shape[1]
    rh, rw = H // h, W // w
    return (w_block.reshape(C, h, rh, w, rw, hidden)
            .sum(axis=(2, 4))
            .reshape(C * h * w, hidden))


def prepare_scalseq(params, in_shapes, *, vmem_limit=None, slab_bytes=None,
                    conv_max_tile=4096, fc1_max_tile=32768, fc2_max_tile=16384):
    """One-time prep: fold BN into conv weights, fold upsample+concat+flatten
    into w1, cast weights to bf16, choose 128-aligned streaming tiles."""
    C = params["channel"]
    (B, cin3, H, W), (_, cin4, h4, w4), (_, cin5, h5, w5) = in_shapes
    hidden = params["w1"].shape[1]
    Fout = params["w2"].shape[1]
    vmem_limit = _default_vmem_limit() if vmem_limit is None else vmem_limit
    slab = (max(2 << 20, min(8 << 20, vmem_limit // 8))
            if slab_bytes is None else slab_bytes)

    def conv_prep(w, scale, bias, cin, hw):
        wt = (w * scale[None, :]).T.astype(jnp.bfloat16)        # (Cout, Cin)
        thw = _lane_tile(hw, 4 * cin + 2 * C, slab, conv_max_tile)
        return wt, bias.reshape(-1, 1).astype(jnp.float32), thw

    assert H % h4 == 0 and W % w4 == 0 and H % h5 == 0 and W % w5 == 0
    w1 = params["w1"]
    n = C * H * W
    w1_blocks = [
        w1[:n],                                          # scale 3 (native)
        _fold_rows(w1[n:2 * n], C, H, W, h4, w4),        # scale 4 (upsampled)
        _fold_rows(w1[2 * n:], C, H, W, h5, w5),         # scale 5 (upsampled)
    ]

    fc1 = []
    for wb in w1_blocks:
        F = wb.shape[0]
        tF = _lane_tile(F, 2 * hidden + 2 * B, slab, fc1_max_tile)
        nblk = _cdiv(F, tF)
        shards = 2 if (nblk >= 2 and nblk % 2 == 0) else 1   # v7x dual-TC split
        bps = nblk // shards
        # Zero-pad w1 rows to a whole number of blocks (cheap, prep-time);
        # the matching activation tail is zero-masked inside the kernel.
        wb = jnp.pad(wb, ((0, nblk * tF - F), (0, 0))).astype(jnp.bfloat16)
        fc1.append(dict(w1=wb, F=F, tF=tF, shards=shards, bps=bps))

    tN = _lane_tile(Fout, 2 * hidden + 4 * B + 4, slab, fc2_max_tile)

    return dict(
        channel=C, out_hw=(H, W), vmem_limit=vmem_limit,
        conv0=conv_prep(*params["conv0"], cin3, H * W),
        conv1=conv_prep(*params["conv1"], cin4, h4 * w4),
        conv2=conv_prep(*params["conv2"], cin5, h5 * w5),
        fc1=fc1,
        b1=params["b1"].reshape(1, hidden).astype(jnp.float32),
        w2=params["w2"].astype(jnp.bfloat16),
        b2=params["b2"].reshape(1, Fout).astype(jnp.float32),
        tN=tN,
    )


# ------------------------------ forward --------------------------------------

def scalseq_forward(prep, xs):
    p3, p4, p5 = xs
    B = p3.shape[0]
    C = prep["channel"]
    H, W = prep["out_hw"]
    vl = prep["vmem_limit"]

    # 1x1 Conv + folded BN + SiLU per scale, NCHW-native, bf16 outputs.
    q3 = conv1x1_bn_silu(p3, *prep["conv0"], vmem_limit=vl)
    q4 = conv1x1_bn_silu(p4, *prep["conv1"], vmem_limit=vl)
    q5 = conv1x1_bn_silu(p5, *prep["conv2"], vmem_limit=vl)

    # Nearest-upsample + channel-concat + flatten are folded into w1 (prep);
    # fc1 streams each scale's folded w1 block against a free reshape of that
    # scale's conv output — no cf concat / pad materialization.
    h_pre = None
    for q, spec in zip((q3, q4, q5), prep["fc1"]):
        part = mlp_fc1_partial(q.reshape(B, -1), spec, vmem_limit=vl)
        psum = part.sum(axis=0)                 # tiny (B, hidden) shard combine
        h_pre = psum if h_pre is None else h_pre + psum

    # fc1 bias + GELU + fc2 (+ bias); Dropout(p=0.0) is the identity.
    y = mlp_fc2(h_pre, prep["b1"], prep["w2"], prep["b2"], prep["tN"],
                vmem_limit=vl)
    return y.reshape(B, C, H, W)


# --------------------------- reference (pure JAX) ----------------------------

def upsample_nearest(x, out_hw):
    # F.interpolate(..., mode='nearest'): src = floor(dst * h / H).
    B, C, h, w = x.shape
    H, W = out_hw
    idx_h = (jnp.arange(H) * h) // H
    idx_w = (jnp.arange(W) * w) // W
    return x[:, :, idx_h][:, :, :, idx_w]


def scalseq_reference(params, xs):
    p3, p4, p5 = xs
    B = p3.shape[0]
    C = params["channel"]
    H, W = p3.shape[2], p3.shape[3]
    hp = jax.lax.Precision.HIGHEST

    def conv_ref(x, w, scale, bias):
        b, cin, h, ww = x.shape
        xm = jnp.transpose(x, (0, 2, 3, 1)).reshape(-1, cin)
        y = jnp.dot(xm, w, precision=hp) * scale + bias
        y = y * jax.nn.sigmoid(y)
        return jnp.transpose(y.reshape(b, h, ww, -1), (0, 3, 1, 2))

    q3 = conv_ref(p3, *params["conv0"])
    q4 = upsample_nearest(conv_ref(p4, *params["conv1"]), (H, W))
    q5 = upsample_nearest(conv_ref(p5, *params["conv2"]), (H, W))
    cf = jnp.concatenate([q3, q4, q5], axis=1).reshape(B, -1)
    h = jnp.dot(cf, params["w1"], precision=hp) + params["b1"]
    h = 0.5 * h * (1.0 + jax.scipy.special.erf(h / math.sqrt(2.0)))
    y = jnp.dot(h, params["w2"], precision=hp) + params["b2"]
    return y.reshape(B, C, H, W)


# ------------------------------ param init ----------------------------------

def init_params(key, inc, channel, S):
    ks = jax.random.split(key, 10)
    eps = 1e-5

    def conv_params(kw, kbn, cin):
        w = jax.random.normal(kw, (cin, channel), jnp.float32) / math.sqrt(cin)
        k1, k2, k3, k4 = jax.random.split(kbn, 4)
        gamma = jax.random.uniform(k1, (channel,), jnp.float32, 0.5, 1.5)
        beta = jax.random.normal(k2, (channel,), jnp.float32) * 0.1
        mean = jax.random.normal(k3, (channel,), jnp.float32) * 0.1
        var = jax.random.uniform(k4, (channel,), jnp.float32, 0.5, 1.5)
        scale = gamma / jnp.sqrt(var + eps)
        bias = beta - mean * scale
        return (w, scale, bias)

    F = channel * 3 * S * S      # analog of channel*3*320*320
    Fout = channel * S * S       # analog of channel*320*320
    w1 = jax.random.uniform(ks[6], (F, channel), jnp.float32, -1.0, 1.0) / math.sqrt(F)
    b1 = jax.random.uniform(ks[7], (channel,), jnp.float32, -1.0, 1.0) / math.sqrt(F)
    w2 = jax.random.uniform(ks[8], (channel, Fout), jnp.float32, -1.0, 1.0) / math.sqrt(channel)
    b2 = jax.random.uniform(ks[9], (Fout,), jnp.float32, -1.0, 1.0) / math.sqrt(channel)
    return dict(
        channel=channel,
        conv0=conv_params(ks[0], ks[1], inc[0]),
        conv1=conv_params(ks[2], ks[3], inc[1]),
        conv2=conv_params(ks[4], ks[5], inc[2]),
        w1=w1, b1=b1, w2=w2, b2=b2,
    )


# --------------------------------- main --------------------------------------

if __name__ == "__main__":
    def run_case(case_key, inc, channel, B, S, **prep_kwargs):
        kp, kx = jax.random.split(case_key)
        params = init_params(kp, inc, channel, S)
        k3, k4, k5 = jax.random.split(kx, 3)
        p3 = jax.random.normal(k3, (B, inc[0], S, S), jnp.float32)
        p4 = jax.random.normal(k4, (B, inc[1], S // 2, S // 2), jnp.float32)
        p5 = jax.random.normal(k5, (B, inc[2], S // 4, S // 4), jnp.float32)
        prep = prepare_scalseq(params, (p3.shape, p4.shape, p5.shape),
                               **prep_kwargs)
        out = jax.block_until_ready(scalseq_forward(prep, (p3, p4, p5)))
        ref = jax.block_until_ready(scalseq_reference(params, (p3, p4, p5)))
        assert out.shape == (B, channel, S, S), out.shape
        np.testing.assert_allclose(np.asarray(out), np.asarray(ref),
                                   rtol=2e-2, atol=2e-2)

    key = jax.random.PRNGKey(0)
    k1, k2 = jax.random.split(key)

    # Default tiling: single-block fast path (toy stand-in for 320x320 sizes).
    run_case(k1, inc=(8, 16, 32), channel=4, B=2, S=16)
    # Tiny slab target: exercises multi-block streaming, the 2-shard fc1 grid
    # and the ragged-tail masking paths on non-power-of-two extents.
    run_case(k2, inc=(8, 16, 32), channel=4, B=2, S=20, slab_bytes=3 * 1024)

    print("KERNEL_OK")
</pallas_src>

<mosaic_0001>
module attributes {stable_mosaic.version = 11 : i64} {
  func.func @conv1x1_bn_silu_kernel(%arg0: i32, %arg1: i32, %arg2: memref<1x8x256xf32, #tpu.memory_space<vmem>>, %arg3: memref<4x8xbf16, #tpu.memory_space<vmem>>, %arg4: memref<4x1xf32, #tpu.memory_space<vmem>>, %arg5: memref<1x4x256xbf16, #tpu.memory_space<vmem>>) attributes {dimension_semantics = [#tpu.dimension_semantics<parallel>, #tpu.dimension_semantics<parallel>], iteration_bounds = array<i64: 2, 1>, scalar_prefetch = 0 : i64, scratch_operands = 0 : i64, tpu.core_type = #tpu.core_type<tc>, window_params = [{transform_indices = @transform_0, window_bounds = array<i64: 1, 8, 256>}, {pipeline_mode = #tpu.pipeline_mode<synchronous>, transform_indices = @transform_1, window_bounds = array<i64: 4, 8>}, {pipeline_mode = #tpu.pipeline_mode<synchronous>, transform_indices = @transform_2, window_bounds = array<i64: 4, 1>}, {transform_indices = @transform_3, window_bounds = array<i64: 1, 4, 256>}]} {
    %c0 = arith.constant 0 : index
    %c0_0 = arith.constant 0 : index
    %0 = vector.load %arg3[%c0, %c0_0] : memref<4x8xbf16, #tpu.memory_space<vmem>>, vector<4x8xbf16>
    %c0_1 = arith.constant 0 : index
    %c0_2 = arith.constant 0 : index
    %c0_3 = arith.constant 0 : index
    %1 = vector.load %arg2[%c0_1, %c0_2, %c0_3] : memref<1x8x256xf32, #tpu.memory_space<vmem>>, vector<1x8x256xf32>
    %2 = vector.shape_cast %1 : vector<1x8x256xf32> to vector<8x256xf32>
    %3 = arith.truncf %2 : vector<8x256xf32> to vector<8x256xbf16>
    %cst = arith.constant dense<0.000000e+00> : vector<4x256xf32>
    %4 = tpu.matmul %0, %3, %cst {dimension_numbers = #tpu.dot_dimension_numbers<[1], [0], [0], [1], [0, 0, 1, 1], [], []>} : vector<4x8xbf16>, vector<8x256xbf16>, vector<4x256xf32> -> vector<4x256xf32>
    %c0_4 = arith.constant 0 : index
    %c0_5 = arith.constant 0 : index
    %5 = vector.load %arg4[%c0_4, %c0_5] : memref<4x1xf32, #tpu.memory_space<vmem>>, vector<4x1xf32>
    %6 = vector.broadcast %5 : vector<4x1xf32> to vector<4x256xf32>
    %7 = arith.addf %4, %6 : vector<4x256xf32>
    %8 = arith.negf %7 : vector<4x256xf32>
    %9 = math.exp %8 : vector<4x256xf32>
    %cst_6 = arith.constant 1.000000e+00 : f32
    %10 = vector.broadcast %cst_6 : f32 to vector<4x256xf32>
    %11 = arith.addf %10, %9 : vector<4x256xf32>
    %12 = arith.divf %10, %11 : vector<4x256xf32>
    %13 = arith.mulf %7, %12 : vector<4x256xf32>
    %14 = arith.truncf %13 : vector<4x256xf32> to vector<4x256xbf16>
    %c0_7 = arith.constant 0 : index
    %c0_8 = arith.constant 0 : index
    %c0_9 = arith.constant 0 : index
    %15 = vector.load %arg5[%c0_7, %c0_8, %c0_9] : memref<1x4x256xbf16, #tpu.memory_space<vmem>>, vector<1x4x256xbf16>
    %16 = vector.shape_cast %15 : vector<1x4x256xbf16> to vector<4x256xbf16>
    %17 = vector.shape_cast %14 : vector<4x256xbf16> to vector<1x4x256xbf16>
    tpu.vector_store %arg5[%c0_7, %c0_8, %c0_9], %17 {strides = array<i32>} : memref<1x4x256xbf16, #tpu.memory_space<vmem>>, vector<1x4x256xbf16>,
    return
  }
  func.func @transform_0(%arg0: i32, %arg1: i32) -> (i32, i32, i32) {
    %c0_i32 = arith.constant 0 : i32
    %c0_i32_0 = arith.constant 0 : i32
    return %arg0, %c0_i32, %arg1 : i32, i32, i32
  }
  func.func @transform_1(%arg0: i32, %arg1: i32) -> (i32, i32) {
    %c0_i32 = arith.constant 0 : i32
    %c0_i32_0 = arith.constant 0 : i32
    %c0_i32_1 = arith.constant 0 : i32
    return %c0_i32, %c0_i32_0 : i32, i32
  }
  func.func @transform_2(%arg0: i32, %arg1: i32) -> (i32, i32) {
    %c0_i32 = arith.constant 0 : i32
    %c0_i32_0 = arith.constant 0 : i32
    %c0_i32_1 = arith.constant 0 : i32
    return %c0_i32, %c0_i32_0 : i32, i32
  }
  func.func @transform_3(%arg0: i32, %arg1: i32) -> (i32, i32, i32) {
    %c0_i32 = arith.constant 0 : i32
    %c0_i32_0 = arith.constant 0 : i32
    return %arg0, %c0_i32, %arg1 : i32, i32, i32
  }
}

</mosaic_0001>

<llo_original>
// kernel: tpu_custom_call.1
$region0: #{tpu_custom_call.1}
  #allocation0 [shape = 'u32[]', space=smem, size = 0x4, offset = 0x4, fixed_abs, tag = 'smem constant byte address 0x4 - core index']
  #allocation1 [shape = 'u32[72,128]{1,0:T(1,128)}', space=vmem, size = 0x9000, scoped, tag = 'internal scratch']
  %s0 = inlined_call_operand.hbm [shape: f32[2,8,256], index: 0, kind: input, shape index: {}]
  %s1 = inlined_call_operand.vmem [shape: bf16[4,8], index: 1, kind: input, shape index: {}]
  %s2 = inlined_call_operand.vmem [shape: f32[4,1], index: 2, kind: input, shape index: {}]
  %s3 = inlined_call_operand.hbm [shape: bf16[2,4,256], index: 3, kind: output, shape index: {}]
  %s4 = sld [smem:[#allocation0]]
  $region49: #{tpu_custom_call.1} parent=0
    _
  %s6 = ssub.s32 1, %s4
  %s7 = scalar_select 0, %s6, %s4
  $region1: #{tpu_custom_call.1} parent=0
    #allocation2 [shape = 'u8[16384]{0}', space=vmem, size = 0x4000, scoped, tag = 'input window, operand 0']
    #allocation3 [shape = 's32[2]{0}', space=sflag, size = 0x8, scoped, tag = 'scoped memory for tpu_custom_call.1']
    #allocation4 [shape = 's32[2]{0}', space=sflag, size = 0x8, scoped, tag = 'scoped memory for tpu_custom_call.1']
    #allocation5 [shape = 'u8[4096]{0}', space=vmem, size = 0x1000, scoped, tag = 'output window, operand 0']
    %8 = vsyncpa [#allocation3], 0
    %s9 = scalar_lea.sflag [#allocation3], 1
    %10 = vsyncpa %s9, 0
    %11 = vsyncpa [#allocation4], 0
    %s12 = scalar_lea.sflag [#allocation4], 1
    %13 = vsyncpa %s12, 0
    loop: start=0, step=1, limit=4
    $region2: #{tpu_custom_call.1} parent=1 // loop_pre_header
      _
    $region3: #{tpu_custom_call.1} parent=1 // loop_header
      %s15 = sphi 0, %s19
      %p16 = scmp.ge.s32.totalorder %s15, 4
      %s22 = sphi 0, %s34
      %s23 = sphi 0, %s30
      %s24 = sphi 0, %s22
      %s25 = sphi 0, %s23
      %s26 = sphi 0, %s24
      %s27 = sphi 0, %s25
      %s39 = sphi 0, %s41
      %s42 = sphi 0, %s39
      %s43 = sphi 0, %s42
      %s59 = sphi 0, %s43
      %s63 = sphi 0, %s63
      %s65 = sphi 0, %s63
      %s66 = sphi 0, %s65
      %s80 = sphi 0, %s66
      %s84 = sphi 0, %s84
      %s86 = sphi 0, %s84
      %s87 = sphi 0, %s86
      %s101 = sphi 0, %s87
      %s109 = sphi 0, %s111
      %s112 = sphi 0, %s109
      %s113 = sphi 0, %s112
      %s129 = sphi 0, %s113
    $region4: #{tpu_custom_call.1} parent=1 // loop_header_branch
      %18 = sbr.rel (%p16) target = $region8
    $region5: #{tpu_custom_call.1} parent=1 // loop_body
      %s20 = ssub.s32 %s15, 1
      %s21 = ssub.s32 %s15, 2
      %s28 = sadd.s32 1, %s23
      %p29 = scmp.ge.s32.totalorder %s28, 1
      %s30 = scalar_select %p29, 0, %s28
      %s31 = sadd.s32 1, %s22
      %s32 = scalar_select %p29, %s31, %s22
      %p33 = scmp.ge.s32.totalorder %s32, 2
      %s34 = scalar_select %p33, 0, %s32
      %s35 = ssub.s32 %s22, %s34
      %s36 = ssub.s32 %s23, %s30
      %s37 = sor.u32 %s35, %s36
      %p38 = scmp.eq.s32.totalorder %s37, 0
      %s40 = sadd.s32 %s39, 1
      %s41 = scalar_select %p38, %s39, %s40
      %p44 = pneg %p38
      %p45 = scmp.eq.s32.totalorder %s15, 1
      %p46 = por %p44, %p45
      %p47 = scmp.ne.s32.totalorder %s39, %s42
      %p48 = scmp.eq.s32.totalorder %s15, 0
      %p49 = por %p47, %p48
      %p50 = scmp.ne.s32.totalorder %s39, %s42
      %p51 = scmp.eq.s32.totalorder %s20, 1
      %p52 = por %p50, %p51
      %p53 = scmp.ne.s32.totalorder %s42, %s43
      %p54 = scmp.eq.s32.totalorder %s20, 0
      %p55 = por %p53, %p54
      %p56 = scmp.ne.s32.totalorder %s42, %s43
      %p57 = scmp.eq.s32.totalorder %s21, 1
      %p58 = por %p56, %p57
      %p60 = scmp.ne.s32.totalorder %s43, %s59
      %p61 = scmp.eq.s32.totalorder %s21, 0
      %p62 = por %p60, %p61
      %s64 = sadd.s32 %s63, 1
      %p67 = scmp.eq.s32.totalorder %s15, 1
      %p68 = scmp.ne.s32.totalorder %s63, %s65
      %p69 = scmp.eq.s32.totalorder %s15, 0
      %p70 = por %p68, %p69
      %p71 = scmp.ne.s32.totalorder %s63, %s65
      %p72 = scmp.eq.s32.totalorder %s20, 1
      %p73 = por %p71, %p72
      %p74 = scmp.ne.s32.totalorder %s65, %s66
      %p75 = scmp.eq.s32.totalorder %s20, 0
      %p76 = por %p74, %p75
      %p77 = scmp.ne.s32.totalorder %s65, %s66
      %p78 = scmp.eq.s32.totalorder %s21, 1
      %p79 = por %p77, %p78
      %p81 = scmp.ne.s32.totalorder %s66, %s80
      %p82 = scmp.eq.s32.totalorder %s21, 0
      %p83 = por %p81, %p82
      %s85 = sadd.s32 %s84, 1
      %p88 = scmp.eq.s32.totalorder %s15, 1
      %p89 = scmp.ne.s32.totalorder %s84, %s86
      %p90 = scmp.eq.s32.totalorder %s15, 0
      %p91 = por %p89, %p90
      %p92 = scmp.ne.s32.totalorder %s84, %s86
      %p93 = scmp.eq.s32.totalorder %s20, 1
      %p94 = por %p92, %p93
      %p95 = scmp.ne.s32.totalorder %s86, %s87
      %p96 = scmp.eq.s32.totalorder %s20, 0
      %p97 = por %p95, %p96
      %p98 = scmp.ne.s32.totalorder %s86, %s87
      %p99 = scmp.eq.s32.totalorder %s21, 1
      %p100 = por %p98, %p99
      %p102 = scmp.ne.s32.totalorder %s87, %s101
      %p103 = scmp.eq.s32.totalorder %s21, 0
      %p104 = por %p102, %p103
      %s105 = ssub.s32 %s22, %s34
      %s106 = ssub.s32 %s23, %s30
      %s107 = sor.u32 %s105, %s106
      %p108 = scmp.eq.s32.totalorder %s107, 0
      %s110 = sadd.s32 %s109, 1
      %s111 = scalar_select %p108, %s109, %s110
      %p114 = pneg %p108
      %p115 = scmp.eq.s32.totalorder %s15, 1
      %p116 = por %p114, %p115
      %p117 = scmp.ne.s32.totalorder %s109, %s112
      %p118 = scmp.eq.s32.totalorder %s15, 0
      %p119 = por %p117, %p118
      %p120 = scmp.ne.s32.totalorder %s109, %s112
      %p121 = scmp.eq.s32.totalorder %s20, 1
      %p122 = por %p120, %p121
      %p123 = scmp.ne.s32.totalorder %s112, %s113
      %p124 = scmp.eq.s32.totalorder %s20, 0
      %p125 = por %p123, %p124
      %p126 = scmp.ne.s32.totalorder %s112, %s113
      %p127 = scmp.eq.s32.totalorder %s21, 1
      %p128 = por %p126, %p127
      %p130 = scmp.ne.s32.totalorder %s113, %s129
      %p131 = scmp.eq.s32.totalorder %s21, 0
      %p132 = por %p130, %p131
      %p133 = scmp.le.s32.totalorder 1, %s15
      %p134 = scmp.lt.s32.totalorder %s15, 3
      %p135 = pnand %p133, %p134
      %p136 = pneg %p135
      // Predicated region
      $region9: #{tpu_custom_call.1} parent=5 // pred_check
        _
      $region10: #{tpu_custom_call.1} parent=5 // pred_check_branch
        %138 = sbr.rel (%p135) target = $region12
      $region11: #{tpu_custom_call.1} parent=5 // pred_region
        %s139 = ssub.s32 %s15, 1
        // Predicated region
        $region13: #{tpu_custom_call.1} parent=11 // pred_check
          %p140 = pneg %p76
        $region14: #{tpu_custom_call.1} parent=11 // pred_check_branch
          %142 = sbr.rel (%p140) target = $region16
        $region15: #{tpu_custom_call.1} parent=11 // pred_region
          _
        $region16: #{tpu_custom_call.1} parent=11 // pred_fallthru
          _
        // Predicated region
        $region17: #{tpu_custom_call.1} parent=11 // pred_check
          %p143 = pneg %p97
        $region18: #{tpu_custom_call.1} parent=11 // pred_check_branch
          %145 = sbr.rel (%p143) target = $region20
        $region19: #{tpu_custom_call.1} parent=11 // pred_region
          _
        $region20: #{tpu_custom_call.1} parent=11 // pred_fallthru
          _
      $region12: #{tpu_custom_call.1} parent=5 // pred_fallthru
        _
      %p146 = scmp.lt.s32.totalorder %s15, 2
      // Predicated region
      $region21: #{tpu_custom_call.1} parent=5 // pred_check
        %p147 = pneg %p146
      $region22: #{tpu_custom_call.1} parent=5 // pred_check_branch
        %149 = sbr.rel (%p147) target = $region24
      $region23: #{tpu_custom_call.1} parent=5 // pred_region
        // Predicated region
        $region25: #{tpu_custom_call.1} parent=23 // pred_check
          %p150 = pneg %p49
        $region26: #{tpu_custom_call.1} parent=23 // pred_check_branch
          %152 = sbr.rel (%p150) target = $region28
        $region27: #{tpu_custom_call.1} parent=23 // pred_region
          %s153 = sand.u32 %s39, 1
          %s154 = scalar_lea.sflag [#allocation3], %s153
          %s155 = sand.u32 %s39, 1
          %s156 = smul.addr %s155, 16
          %s157 = scalar_lea.vmem [#allocation2], %s156
          %s158 = smul.u32 2, %s23
          %160 = vsyncadd %s154, 0
          %s161 = smul.addr %s22, 2
          %s162 = sadd.s32 %s158, %s161
          %s163 = smul.addr %s162, 8
          %s164 = scalar_lea.hbm %s0, %s163
          %s166 = sshll.u32 %s164, 4
          %s167 = int_to_ptr.hbm [resolvable:$true] %s166
          %s168 = sshll.u32 %s157, 4
          %s169 = int_to_ptr.vmem [resolvable:$true] %s168
          %171 = dma.hbm_to_vmem [thread:$0]  %s167, 256, %s169, %s154
        $region28: #{tpu_custom_call.1} parent=23 // pred_fallthru
          _
      $region24: #{tpu_custom_call.1} parent=5 // pred_fallthru
        _
      %p172 = scmp.le.s32.totalorder 1, %s15
      %p173 = scmp.lt.s32.totalorder %s15, 3
      %p174 = pnand %p172, %p173
      %p175 = pneg %p174
      // Predicated region
      $region29: #{tpu_custom_call.1} parent=5 // pred_check
        _
      $region30: #{tpu_custom_call.1} parent=5 // pred_check_branch
        %177 = sbr.rel (%p174) target = $region32
      $region31: #{tpu_custom_call.1} parent=5 // pred_region
        %s178 = ssub.s32 %s15, 1
        %s179 = sand.u32 %s42, 1
        %s180 = scalar_lea.sflag [#allocation3], %s179
        %s181 = sand.u32 %s42, 1
        %s182 = smul.addr %s181, 16
        %s183 = scalar_lea.vmem [#allocation2], %s182
        // Predicated region
        $region33: #{tpu_custom_call.1} parent=31 // pred_check
          %p184 = pneg %p55
        $region34: #{tpu_custom_call.1} parent=31 // pred_check_branch
          %186 = sbr.rel (%p184) target = $region36
        $region35: #{tpu_custom_call.1} parent=31 // pred_region
          %188 = dma.done %s180, 256
        $region36: #{tpu_custom_call.1} parent=31 // pred_fallthru
          _
        %s189 = sand.u32 %s42, 1
        %s190 = scalar_lea.sflag [#allocation3], %s189
        %s191 = sand.u32 %s42, 1
        %s192 = smul.addr %s191, 16
        %s193 = scalar_lea.vmem [#allocation2], %s192
        %p194 = pneg %p55
        %p195 = pneg %p52
        %p196 = pneg %p76
        %p197 = pneg %p73
        %p198 = pneg %p97
        %p199 = pneg %p94
        %p200 = pneg %p125
        %p201 = pneg %p122
        %s202 = sand.u32 %s112, 1
        %s203 = scalar_lea.sflag [#allocation4], %s202
        %s204 = sand.u32 %s112, 1
        %s205 = smul.addr %s204, 4
        %s206 = scalar_lea.vmem [#allocation5], %s205
        %s207 = smul.u32 2, %s25
        %s208 = smul.u32 2, %s25
        %v210 = vld [vmem:[%s1] sm:$0x3]
        %v211 = vld [vmem:[%s183] sm:$0xff]
        %v212 = vld [vmem:[%s183 + $0x8] sm:$0xff]
        %v213 = vpack.c.bf16 %v211, %v211
        %v214 = vpack.c.bf16 %v212, %v212
        %v215 = vld [vmem:[%s2] sm:$0xf]
        %217 = vset.pattern.permute.xlu0 0
        %218 = vperm.xlu0 %217, %v215
        %v219 = vpop.permute.xlu0 %218
        %vm221 = vcmask 64512
        %v223 = vsel %vm221, %v210, 0
        %vm225 = vcmask 1043456
        %v227 = vsel %vm225, %v213, 0
        %v230 = vsel %vm225, %v214, 0
        %232 = vmatpush.bf16.msra.mxu0 0
        %233 = vmatpush.bf16.msra.mxu0 0
        %234 = vmatpush.bf16.msra.mxu0 0
        %235 = vmatpush.bf16.msra.mxu0 0
        %236 = vmatpush.bf16.msra.mxu0 0
        %237 = vmatpush.bf16.msra.mxu0 0
        %238 = vmatpush.bf16.msra.mxu0 0
        %239 = vmatpush.bf16.msra.mxu0 %v227
        %240 = vmatmul.bf16.gmra.mxu0 %v223
        %v241 = vpop.f32.mrf.mxu0
        %v242 = vadd.f32 %v219, %v241
        %v243 = vpop.f32.mrf.mxu0
        %244 = vdwg.mxu0
        %245 = vmatpush.bf16.msra.mxu0 0
        %246 = vmatpush.bf16.msra.mxu0 0
        %247 = vmatpush.bf16.msra.mxu0 0
        %248 = vmatpush.bf16.msra.mxu0 0
        %249 = vmatpush.bf16.msra.mxu0 0
        %250 = vmatpush.bf16.msra.mxu0 0
        %251 = vmatpush.bf16.msra.mxu0 0
        %252 = vmatpush.bf16.msra.mxu0 %v230
        %253 = vmatmul.bf16.gmra.mxu0 %v223
        %v254 = vpop.f32.mrf.mxu0
        %v255 = vadd.f32 %v219, %v254
        %v256 = vpop.f32.mrf.mxu0
        %257 = vdwg.mxu0
        %v258 = vxor.u32 %v242, 2147483648
        %v259 = vxor.u32 %v255, 2147483648
        %v260 = vmul.f32 %v258, 1.442695
        %v261 = vpow.pop %v260
        %v262 = vmul.f32 %v259, 1.442695
        %v263 = vpow.pop %v262
        %v264 = vadd.f32 %v261, 1.0
        %v265 = vadd.f32 %v263, 1.0
        %v266 = vrcp.pop %v264
        %v267 = vmul.f32 %v264, %v266
        %v268 = vsub.f32 1.0, %v267
        %v269 = vmul.f32 %v266, %v268
        %v270 = vadd.f32 %v266, %v269
        %vm271 = vweird.f32 %v264
        %vm272 = vweird.f32 %v266
        %vm273 = vmor %vm271, %vm272
        %v274 = vsel %vm273, %v266, %v270
        %v275 = vand.u32 2147483647, %v264
        %vm276 = vcmp.eq.f32.partialorder %v275, 8.507059e+37
        %v277 = vand.u32 %v264, 2147483648
        %v278 = vor.u32 1.1754944e-38, %v277
        %v279 = vsel %vm276, %v278, %v274
        %v280 = vmul.f32 1.0, %v279
        %v281 = vrcp.pop %v265
        %v282 = vmul.f32 %v265, %v281
        %v283 = vsub.f32 1.0, %v282
        %v284 = vmul.f32 %v281, %v283
        %v285 = vadd.f32 %v281, %v284
        %vm286 = vweird.f32 %v265
        %vm287 = vweird.f32 %v281
        %vm288 = vmor %vm286, %vm287
        %v289 = vsel %vm288, %v281, %v285
        %v290 = vand.u32 2147483647, %v265
        %vm291 = vcmp.eq.f32.partialorder %v290, 8.507059e+37
        %v292 = vand.u32 %v265, 2147483648
        %v293 = vor.u32 1.1754944e-38, %v292
        %v294 = vsel %vm291, %v293, %v289
        %v295 = vmul.f32 1.0, %v294
        %v296 = vmul.f32 %v242, %v280
        %v297 = vmul.f32 %v255, %v295
        %v298 = vpack.c.bf16 %v297, %v296
        %v300 = vrot.slane %v298, 2
        %vm301 = vcmask 1041408
        %v304 = vsel %vm301, %v298, %v300
        %306 = vst [vmem:[%s206] sm:$0xf] %v304
        %s307 = sand.u32 %s112, 1
        %s308 = scalar_lea.sflag [#allocation4], %s307
        %s309 = sand.u32 %s112, 1
        %s310 = smul.addr %s309, 4
        %s311 = scalar_lea.vmem [#allocation5], %s310
        // Predicated region
        $region37: #{tpu_custom_call.1} parent=31 // pred_check
          %p312 = pneg %p122
        $region38: #{tpu_custom_call.1} parent=31 // pred_check_branch
          %314 = sbr.rel (%p312) target = $region40
        $region39: #{tpu_custom_call.1} parent=31 // pred_region
          %s315 = smul.u32 2, %s25
          %317 = vsyncadd %s308, 0
          %s318 = smul.addr %s24, 2
          %s319 = sadd.s32 %s315, %s318
          %s320 = smul.addr %s319, 2
          %s321 = scalar_lea.hbm %s3, %s320
          %s323 = sshll.u32 %s311, 4
          %s324 = int_to_ptr.vmem [resolvable:$true] %s323
          %s325 = sshll.u32 %s321, 4
          %s326 = int_to_ptr.hbm [resolvable:$true] %s325
          %328 = dma.vmem_to_hbm [thread:$0]  %s324, 64, %s326, %s308
        $region40: #{tpu_custom_call.1} parent=31 // pred_fallthru
          _
      $region32: #{tpu_custom_call.1} parent=5 // pred_fallthru
        _
      %p329 = scmp.le.s32.totalorder 2, %s15
      // Predicated region
      $region41: #{tpu_custom_call.1} parent=5 // pred_check
        %p330 = pneg %p329
      $region42: #{tpu_custom_call.1} parent=5 // pred_check_branch
        %332 = sbr.rel (%p330) target = $region44
      $region43: #{tpu_custom_call.1} parent=5 // pred_region
        %s333 = ssub.s32 %s15, 2
        // Predicated region
        $region45: #{tpu_custom_call.1} parent=43 // pred_check
          %p334 = pneg %p128
        $region46: #{tpu_custom_call.1} parent=43 // pred_check_branch
          %336 = sbr.rel (%p334) target = $region48
        $region47: #{tpu_custom_call.1} parent=43 // pred_region
          %s337 = sand.u32 %s113, 1
          %s338 = scalar_lea.sflag [#allocation4], %s337
          %s339 = sand.u32 %s113, 1
          %s340 = smul.addr %s339, 4
          %s341 = scalar_lea.vmem [#allocation5], %s340
          %343 = dma.done %s338, 64
        $region48: #{tpu_custom_call.1} parent=43 // pred_fallthru
          _
      $region44: #{tpu_custom_call.1} parent=5 // pred_fallthru
        _
    $region6: #{tpu_custom_call.1} parent=1 // loop_footer
      %s19 = sadd.s32 1, %s15
    $region7: #{tpu_custom_call.1} parent=1 // loop_footer_branch
      %14 = sbr.rel target = $region3
    $region8: #{tpu_custom_call.1} parent=1 // loop_exit
      _
    %344 = vsyncpa [#allocation3], 1
    %s345 = scalar_lea.sflag [#allocation3], 1
    %346 = vsyncpa %s345, 1
    %347 = vsyncpa [#allocation4], 1
    %s348 = scalar_lea.sflag [#allocation4], 1
    %349 = vsyncpa %s348, 1

</llo_original>
